<compile_context>
chip_gen: v6e
topology: v6e:2x2x1
jax: 0.10.0
libtpu: 0.0.40
codegen_flags: <defaults>
</compile_context>

<pallas_src>
import functools

import jax
import jax.numpy as jnp
from jax.experimental import pallas as pl
from jax.experimental.pallas import tpu as pltpu


def _round_up(a: int, m: int) -> int:
    return ((a + m - 1) // m) * m


# --------------------------------------------------------------------------- #
# Kernel
# --------------------------------------------------------------------------- #
def _maxout_kernel(x_ref, w_ref, b_ref, o_ref, acc_ref, *, k: int, tn: int):
    # x_ref  : (tb, tk)      bf16
    # w_ref  : (tk, k*tn)    bf16   (k pieces as contiguous tn-wide lane blocks)
    # b_ref  : (1,  k*tn)    f32
    # o_ref  : (tb, tn)      f32
    # acc_ref: (tb, k*tn)    f32    (resident across the IN reduction)
    kk = pl.program_id(2)

    @pl.when(kk == 0)
    def _():
        # Initialize the accumulator with the bias (broadcast along sublanes);
        # the epilogue then only has to take the max.
        acc_ref[...] = jnp.broadcast_to(b_ref[...], acc_ref.shape)

    # One fused MXU matmul covering all k pieces of this OUT tile.
    acc_ref[...] += jnp.dot(x_ref[...], w_ref[...],
                            preferred_element_type=jnp.float32)

    @pl.when(kk == pl.num_programs(2) - 1)
    def _():
        res = acc_ref[:, 0:tn]
        for p in range(1, k):
            res = jnp.maximum(res, acc_ref[:, p * tn:(p + 1) * tn])
        o_ref[...] = res.astype(o_ref.dtype)


# --------------------------------------------------------------------------- #
# Tiling plan (one-time, shared by prepare + forward)
# --------------------------------------------------------------------------- #
def plan_maxout_tiles(batch, in_features, out_features, k,
                      tb=512, tn=256, tk=512, collapse_in_max=4096):
    """Pick lane/sublane-aligned tiles; collapse IN when it fits VMEM."""
    # bf16 x packs 16 sublanes per vreg -> align tb to 16.
    tb = _round_up(min(tb, _round_up(batch, 16)), 16)
    tn = min(tn, _round_up(out_features, 128))

    # Megacore (v7x, 2 TCs): make sure the parallel axes expose >= 2 tiles.
    b_tiles = _round_up(batch, tb) // tb
    out_tiles = _round_up(out_features, tn) // tn
    if b_tiles == 1 and out_tiles == 1 and tn > 128:
        tn_half = _round_up(max(tn // 2, 128), 128)
        if _round_up(out_features, tn_half) // tn_half >= 2:
            tn = tn_half

    inp_full = _round_up(in_features, 128)
    if inp_full <= collapse_in_max:
        tk = inp_full                      # collapse reduction -> grid last dim == 1
    else:
        tk = _round_up(min(tk, inp_full), 128)

    assert tb % 16 == 0 and tn % 128 == 0 and tk % 128 == 0
    return tb, tn, tk


# --------------------------------------------------------------------------- #
# One-time parameter preparation (hoisted out of the per-call path)
# --------------------------------------------------------------------------- #
def prepare_maxout_params(w_pt, b_pt, k, tn, tk):
    """w_pt: (out*k, in) PyTorch Linear weight, b_pt: (out*k,) bias.

    Returns:
      w_fused: (INp, (OUTp//tn)*k*tn) bf16 — per OUT tile, the k pieces are laid
               out as contiguous tn-wide, 128-aligned lane blocks.
      b_fused: (1,  (OUTp//tn)*k*tn) f32 — same layout.
    """
    out_k, in_features = w_pt.shape
    out_features = out_k // k
    outp = _round_up(out_features, tn)
    inp = _round_up(in_features, tk)
    nj = outp // tn

    # x @ w_pt.T : column c = j*k + p is piece p of output unit j.
    w = jnp.transpose(w_pt, (1, 0)).reshape(in_features, out_features, k)
    w = jnp.pad(w, ((0, inp - in_features), (0, outp - out_features), (0, 0)))
    w = (w.reshape(inp, nj, tn, k)
          .transpose(0, 1, 3, 2)                # (INp, nj, k, tn)
          .reshape(inp, nj * k * tn)
          .astype(jnp.bfloat16))

    b = b_pt.reshape(out_features, k)
    b = jnp.pad(b, ((0, outp - out_features), (0, 0)))
    b = (b.reshape(nj, tn, k)
          .transpose(0, 2, 1)                   # (nj, k, tn)
          .reshape(1, nj * k * tn)
          .astype(jnp.float32))
    return w, b


# --------------------------------------------------------------------------- #
# Per-call forward
# --------------------------------------------------------------------------- #
def maxout_forward(x, w_fused, b_fused, *, k, out_features, tb, tn, tk):
    """x: (B, IN) f32/bf16, prepared fused params -> (B, out_features) f32."""
    B, IN = x.shape
    inp_w, k_outp = w_fused.shape
    outp = k_outp // k
    bp = _round_up(B, tb)
    inp = _round_up(IN, tk)
    assert inp == inp_w, "w_fused was prepared with a different tk / in_features"
    assert outp % tn == 0

    # Only x is touched per call; skip the pad when already tile-aligned.
    x_bf = x if x.dtype == jnp.bfloat16 else x.astype(jnp.bfloat16)
    if (bp, inp) != (B, IN):
        x_bf = jnp.pad(x_bf, ((0, bp - B), (0, inp - IN)))

    grid = (bp // tb, outp // tn, inp // tk)

    # VMEM footprint: double-buffered input/output blocks + resident f32 acc.
    footprint = (2 * (tb * tk * 2              # x block (bf16)
                      + tk * k * tn * 2        # w block (bf16)
                      + 1 * k * tn * 4         # bias block (f32)
                      + tb * tn * 4)           # out block (f32)
                 + tb * k * tn * 4)            # accumulator scratch (f32)
    vmem_limit = int(min(max(footprint + (2 << 20), 16 << 20), 48 << 20))

    out = pl.pallas_call(
        functools.partial(_maxout_kernel, k=k, tn=tn),
        out_shape=jax.ShapeDtypeStruct((bp, outp), jnp.float32),
        grid_spec=pltpu.PrefetchScalarGridSpec(
            num_scalar_prefetch=0,
            grid=grid,
            in_specs=[
                # x block is invariant across the OUT axis -> no re-DMA on revisit.
                pl.BlockSpec((tb, tk), lambda i, j, kk: (i, kk)),
                pl.BlockSpec((tk, k * tn), lambda i, j, kk: (kk, j)),
                pl.BlockSpec((1, k * tn), lambda i, j, kk: (0, j)),
            ],
            out_specs=pl.BlockSpec((tb, tn), lambda i, j, kk: (i, j)),
            scratch_shapes=[pltpu.VMEM((tb, k * tn), jnp.float32)],
        ),
        compiler_params=pltpu.CompilerParams(
            dimension_semantics=("parallel", "parallel", "arbitrary"),
            vmem_limit_bytes=vmem_limit,
        ),
    )(x_bf, w_fused, b_fused)

    return out[:B, :out_features]


# --------------------------------------------------------------------------- #
# Init + reference (PyTorch semantics)
# --------------------------------------------------------------------------- #
def init_maxout_params(key, in_features, out_features, k):
    """nn.Linear(in_features, out_features*k) style init: U(-1/sqrt(in), 1/sqrt(in))."""
    kw, kb = jax.random.split(key)
    bound = 1.0 / (in_features ** 0.5)
    w_pt = jax.random.uniform(kw, (out_features * k, in_features),
                              minval=-bound, maxval=bound, dtype=jnp.float32)
    b_pt = jax.random.uniform(kb, (out_features * k,),
                              minval=-bound, maxval=bound, dtype=jnp.float32)
    return w_pt, b_pt


def maxout_reference(x, w_pt, b_pt, k):
    """Pure-JAX f32 reference reproducing the PyTorch forward exactly."""
    y = x @ w_pt.T + b_pt                      # (B, out*k)
    B, ok = y.shape
    return jnp.max(y.reshape(B, ok // k, k), axis=-1)


if __name__ == "__main__":
    key = jax.random.PRNGKey(0)
    kx, kp = jax.random.split(key)

    # Small demo shapes: exercise B/OUT padding, the fused k-piece layout, the
    # megacore OUT-tile split, and the collapsed IN reduction.
    in_features, out_features, k = 256, 160, 2
    B = 20

    x = jax.random.normal(kx, (B, in_features), dtype=jnp.float32)
    w_pt, b_pt = init_maxout_params(kp, in_features, out_features, k)

    # One-time: plan tiles and lay out / pad / cast the weights.
    tb, tn, tk = plan_maxout_tiles(B, in_features, out_features, k)
    w_fused, b_fused = prepare_maxout_params(w_pt, b_pt, k, tn, tk)
    w_fused, b_fused = jax.block_until_ready((w_fused, b_fused))

    out = maxout_forward(x, w_fused, b_fused, k=k, out_features=out_features,
                         tb=tb, tn=tn, tk=tk)
    out = jax.block_until_ready(out)

    ref = maxout_reference(x, w_pt, b_pt, k)
    assert out.shape == (B, out_features)
    # bf16 MXU inputs with f32 accumulation -> bf16-friendly tolerance.
    max_err = float(jnp.max(jnp.abs(out - ref)))
    assert jnp.allclose(out, ref, atol=5e-2, rtol=5e-2), (
        f"mismatch vs reference, max abs err {max_err}")

    print("KERNEL_OK")
</pallas_src>

<mosaic_0001>
module attributes {stable_mosaic.version = 11 : i64} {
  func.func @_maxout_kernel(%arg0: i32, %arg1: i32, %arg2: i32, %arg3: memref<32x256xbf16, #tpu.memory_space<vmem>>, %arg4: memref<256x256xbf16, #tpu.memory_space<vmem>>, %arg5: memref<1x256xf32, #tpu.memory_space<vmem>>, %arg6: memref<32x128xf32, #tpu.memory_space<vmem>>, %arg7: memref<32x256xf32, #tpu.memory_space<vmem>>) attributes {dimension_semantics = [#tpu.dimension_semantics<parallel>, #tpu.dimension_semantics<parallel>, #tpu.dimension_semantics<arbitrary>], iteration_bounds = array<i64: 1, 2, 1>, scalar_prefetch = 0 : i64, scratch_operands = 1 : i64, tpu.core_type = #tpu.core_type<tc>, window_params = [{transform_indices = @transform_0, window_bounds = array<i64: 32, 256>}, {transform_indices = @transform_1, window_bounds = array<i64: 256, 256>}, {transform_indices = @transform_2, window_bounds = array<i64: 1, 256>}, {transform_indices = @transform_3, window_bounds = array<i64: 32, 128>}]} {
    %c0_i32 = arith.constant 0 : i32
    %0 = arith.cmpi eq, %arg2, %c0_i32 : i32
    %1 = arith.extui %0 : i1 to i32
    %c0_i32_0 = arith.constant 0 : i32
    %2 = arith.cmpi ne, %1, %c0_i32_0 : i32
    scf.if %2 {
      %c0_10 = arith.constant 0 : index
      %c0_11 = arith.constant 0 : index
      %12 = vector.load %arg5[%c0_10, %c0_11] : memref<1x256xf32, #tpu.memory_space<vmem>>, vector<1x256xf32>
      %13 = vector.shape_cast %12 : vector<1x256xf32> to vector<1x256xf32>
      %14 = vector.broadcast %13 : vector<1x256xf32> to vector<32x256xf32>
      %c0_12 = arith.constant 0 : index
      %c0_13 = arith.constant 0 : index
      %15 = vector.load %arg7[%c0_12, %c0_13] : memref<32x256xf32, #tpu.memory_space<vmem>>, vector<32x256xf32>
      tpu.vector_store %arg7[%c0_12, %c0_13], %14 {strides = array<i32>} : memref<32x256xf32, #tpu.memory_space<vmem>>, vector<32x256xf32>,
    } else {
    }
    %c0 = arith.constant 0 : index
    %c0_1 = arith.constant 0 : index
    %3 = vector.load %arg7[%c0, %c0_1] : memref<32x256xf32, #tpu.memory_space<vmem>>, vector<32x256xf32>
    %c0_2 = arith.constant 0 : index
    %c0_3 = arith.constant 0 : index
    %4 = vector.load %arg3[%c0_2, %c0_3] : memref<32x256xbf16, #tpu.memory_space<vmem>>, vector<32x256xbf16>
    %c0_4 = arith.constant 0 : index
    %c0_5 = arith.constant 0 : index
    %5 = vector.load %arg4[%c0_4, %c0_5] : memref<256x256xbf16, #tpu.memory_space<vmem>>, vector<256x256xbf16>
    %cst = arith.constant dense<0.000000e+00> : vector<32x256xf32>
    %6 = tpu.matmul %4, %5, %cst {dimension_numbers = #tpu.dot_dimension_numbers<[1], [0], [0], [1], [0, 0, 1, 1], [], []>} : vector<32x256xbf16>, vector<256x256xbf16>, vector<32x256xf32> -> vector<32x256xf32>
    %7 = arith.addf %3, %6 : vector<32x256xf32>
    %c0_6 = arith.constant 0 : index
    %c0_7 = arith.constant 0 : index
    %8 = vector.load %arg7[%c0_6, %c0_7] : memref<32x256xf32, #tpu.memory_space<vmem>>, vector<32x256xf32>
    tpu.vector_store %arg7[%c0_6, %c0_7], %7 {strides = array<i32>} : memref<32x256xf32, #tpu.memory_space<vmem>>, vector<32x256xf32>,
    %c0_i32_8 = arith.constant 0 : i32
    %9 = arith.cmpi eq, %arg2, %c0_i32_8 : i32
    %10 = arith.extui %9 : i1 to i32
    %c0_i32_9 = arith.constant 0 : i32
    %11 = arith.cmpi ne, %10, %c0_i32_9 : i32
    scf.if %11 {
      %c0_10 = arith.constant 0 : index
      %c0_11 = arith.constant 0 : index
      %12 = vector.load %arg7[%c0_10, %c0_11] : memref<32x256xf32, #tpu.memory_space<vmem>>, vector<32x128xf32>
      %c0_12 = arith.constant 0 : index
      %c128 = arith.constant 128 : index
      %13 = vector.load %arg7[%c0_12, %c128] : memref<32x256xf32, #tpu.memory_space<vmem>>, vector<32x128xf32>
      %14 = arith.maximumf %12, %13 : vector<32x128xf32>
      %c0_13 = arith.constant 0 : index
      %c0_14 = arith.constant 0 : index
      %15 = vector.load %arg6[%c0_13, %c0_14] : memref<32x128xf32, #tpu.memory_space<vmem>>, vector<32x128xf32>
      tpu.vector_store %arg6[%c0_13, %c0_14], %14 {strides = array<i32>} : memref<32x128xf32, #tpu.memory_space<vmem>>, vector<32x128xf32>,
    } else {
    }
    return
  }
  func.func @transform_0(%arg0: i32, %arg1: i32, %arg2: i32) -> (i32, i32) {
    %c0_i32 = arith.constant 0 : i32
    return %arg0, %arg2 : i32, i32
  }
  func.func @transform_1(%arg0: i32, %arg1: i32, %arg2: i32) -> (i32, i32) {
    %c0_i32 = arith.constant 0 : i32
    return %arg2, %arg1 : i32, i32
  }
  func.func @transform_2(%arg0: i32, %arg1: i32, %arg2: i32) -> (i32, i32) {
    %c0_i32 = arith.constant 0 : i32
    %c0_i32_0 = arith.constant 0 : i32
    return %c0_i32, %arg1 : i32, i32
  }
  func.func @transform_3(%arg0: i32, %arg1: i32, %arg2: i32) -> (i32, i32) {
    %c0_i32 = arith.constant 0 : i32
    return %arg0, %arg1 : i32, i32
  }
}

</mosaic_0001>

<llo_original>
// kernel: tpu_custom_call.1
$region0: #{tpu_custom_call.1}
  #allocation0 [shape = 'u32[]', space=smem, size = 0x4, offset = 0x4, fixed_abs, tag = 'smem constant byte address 0x4 - core index']
  #allocation1 [shape = 'u32[144,128]{1,0:T(1,128)}', space=vmem, size = 0x12000, scoped, tag = 'internal scratch']
  #allocation2 [shape = 'f32[32,256]{1,0:T(8,128)}', space=vmem, size = 0x8000, scoped, tag = 'scratch operand']
  %s0 = inlined_call_operand.hbm [shape: bf16[32,256], index: 0, kind: input, shape index: {}]
  %s1 = inlined_call_operand.hbm [shape: bf16[256,512], index: 1, kind: input, shape index: {}]
  %s2 = inlined_call_operand.hbm [shape: f32[1,512], index: 2, kind: input, shape index: {}]
  %s3 = inlined_call_operand.hbm [shape: f32[32,256], index: 3, kind: output, shape index: {}]
  %s4 = sld [smem:[#allocation0]]
  $region65: #{tpu_custom_call.1} parent=0
    _
  %s6 = ssub.s32 1, %s4
  %s7 = scalar_select 0, %s6, %s4
  $region1: #{tpu_custom_call.1} parent=0
    #allocation3 [shape = 'u8[16384]{0}', space=vmem, size = 0x4000, scoped, tag = 'input window, operand 0, single buffered']
    #allocation4 [shape = 's32[2]{0}', space=sflag, size = 0x8, scoped, tag = 'scoped memory for tpu_custom_call.1']
    #allocation5 [shape = 's32[2]{0}', space=sflag, size = 0x8, scoped, tag = 'scoped memory for tpu_custom_call.1']
    #allocation6 [shape = 'u8[262144]{0}', space=vmem, size = 0x40000, scoped, tag = 'input window, operand 1']
    #allocation7 [shape = 's32[2]{0}', space=sflag, size = 0x8, scoped, tag = 'scoped memory for tpu_custom_call.1']
    #allocation8 [shape = 'u8[2048]{0}', space=vmem, size = 0x800, scoped, tag = 'input window, operand 2']
    #allocation9 [shape = 'u8[32768]{0}', space=vmem, size = 0x8000, scoped, tag = 'output window, operand 0']
    %8 = vsyncpa [#allocation4], 0
    %9 = vsyncpa [#allocation7], 0
    %s10 = scalar_lea.sflag [#allocation7], 1
    %11 = vsyncpa %s10, 0
    %12 = vsyncpa [#allocation5], 0
    %s13 = scalar_lea.sflag [#allocation5], 1
    %14 = vsyncpa %s13, 0
    loop: start=0, step=1, limit=4
    $region2: #{tpu_custom_call.1} parent=1 // loop_pre_header
      _
    $region3: #{tpu_custom_call.1} parent=1 // loop_header
      %s16 = sphi 0, %s20
      %p17 = scmp.ge.s32.totalorder %s16, 4
      %s23 = sphi 0, %s42
      %s24 = sphi 0, %s38
      %s25 = sphi 0, %s34
      %s26 = sphi 0, %s23
      %s27 = sphi 0, %s24
      %s28 = sphi 0, %s25
      %s29 = sphi 0, %s26
      %s30 = sphi 0, %s27
      %s31 = sphi 0, %s28
      %s47 = sphi 0, %s49
      %s50 = sphi 0, %s47
      %s51 = sphi 0, %s50
      %s67 = sphi 0, %s51
      %s75 = sphi 0, %s77
      %s78 = sphi 0, %s75
      %s79 = sphi 0, %s78
      %s95 = sphi 0, %s79
      %s101 = sphi 0, %s103
      %s104 = sphi 0, %s101
      %s105 = sphi 0, %s104
      %s121 = sphi 0, %s105
      %s129 = sphi 0, %s131
      %s132 = sphi 0, %s129
      %s133 = sphi 0, %s132
      %s149 = sphi 0, %s133
    $region4: #{tpu_custom_call.1} parent=1 // loop_header_branch
      %19 = sbr.rel (%p17) target = $region8
    $region5: #{tpu_custom_call.1} parent=1 // loop_body
      %s21 = ssub.s32 %s16, 1
      %s22 = ssub.s32 %s16, 2
      %s32 = sadd.s32 1, %s25
      %p33 = scmp.ge.s32.totalorder %s32, 1
      %s34 = scalar_select %p33, 0, %s32
      %s35 = sadd.s32 1, %s24
      %s36 = scalar_select %p33, %s35, %s24
      %p37 = scmp.ge.s32.totalorder %s36, 2
      %s38 = scalar_select %p37, 0, %s36
      %s39 = sadd.s32 1, %s23
      %s40 = scalar_select %p37, %s39, %s23
      %p41 = scmp.ge.s32.totalorder %s40, 1
      %s42 = scalar_select %p41, 0, %s40
      %s43 = ssub.s32 %s23, %s42
      %s44 = ssub.s32 %s25, %s34
      %s45 = sor.u32 %s43, %s44
      %p46 = scmp.eq.s32.totalorder %s45, 0
      %s48 = sadd.s32 %s47, 1
      %s49 = scalar_select %p46, %s47, %s48
      %p52 = pneg %p46
      %p53 = scmp.eq.s32.totalorder %s16, 1
      %p54 = por %p52, %p53
      %p55 = scmp.ne.s32.totalorder %s47, %s50
      %p56 = scmp.eq.s32.totalorder %s16, 0
      %p57 = por %p55, %p56
      %p58 = scmp.ne.s32.totalorder %s47, %s50
      %p59 = scmp.eq.s32.totalorder %s21, 1
      %p60 = por %p58, %p59
      %p61 = scmp.ne.s32.totalorder %s50, %s51
      %p62 = scmp.eq.s32.totalorder %s21, 0
      %p63 = por %p61, %p62
      %p64 = scmp.ne.s32.totalorder %s50, %s51
      %p65 = scmp.eq.s32.totalorder %s22, 1
      %p66 = por %p64, %p65
      %p68 = scmp.ne.s32.totalorder %s51, %s67
      %p69 = scmp.eq.s32.totalorder %s22, 0
      %p70 = por %p68, %p69
      %s71 = ssub.s32 %s25, %s34
      %s72 = ssub.s32 %s24, %s38
      %s73 = sor.u32 %s71, %s72
      %p74 = scmp.eq.s32.totalorder %s73, 0
      %s76 = sadd.s32 %s75, 1
      %s77 = scalar_select %p74, %s75, %s76
      %p80 = pneg %p74
      %p81 = scmp.eq.s32.totalorder %s16, 1
      %p82 = por %p80, %p81
      %p83 = scmp.ne.s32.totalorder %s75, %s78
      %p84 = scmp.eq.s32.totalorder %s16, 0
      %p85 = por %p83, %p84
      %p86 = scmp.ne.s32.totalorder %s75, %s78
      %p87 = scmp.eq.s32.totalorder %s21, 1
      %p88 = por %p86, %p87
      %p89 = scmp.ne.s32.totalorder %s78, %s79
      %p90 = scmp.eq.s32.totalorder %s21, 0
      %p91 = por %p89, %p90
      %p92 = scmp.ne.s32.totalorder %s78, %s79
      %p93 = scmp.eq.s32.totalorder %s22, 1
      %p94 = por %p92, %p93
      %p96 = scmp.ne.s32.totalorder %s79, %s95
      %p97 = scmp.eq.s32.totalorder %s22, 0
      %p98 = por %p96, %p97
      %s99 = ssub.s32 %s24, %s38
      %p100 = scmp.eq.s32.totalorder %s99, 0
      %s102 = sadd.s32 %s101, 1
      %s103 = scalar_select %p100, %s101, %s102
      %p106 = pneg %p100
      %p107 = scmp.eq.s32.totalorder %s16, 1
      %p108 = por %p106, %p107
      %p109 = scmp.ne.s32.totalorder %s101, %s104
      %p110 = scmp.eq.s32.totalorder %s16, 0
      %p111 = por %p109, %p110
      %p112 = scmp.ne.s32.totalorder %s101, %s104
      %p113 = scmp.eq.s32.totalorder %s21, 1
      %p114 = por %p112, %p113
      %p115 = scmp.ne.s32.totalorder %s104, %s105
      %p116 = scmp.eq.s32.totalorder %s21, 0
      %p117 = por %p115, %p116
      %p118 = scmp.ne.s32.totalorder %s104, %s105
      %p119 = scmp.eq.s32.totalorder %s22, 1
      %p120 = por %p118, %p119
      %p122 = scmp.ne.s32.totalorder %s105, %s121
      %p123 = scmp.eq.s32.totalorder %s22, 0
      %p124 = por %p122, %p123
      %s125 = ssub.s32 %s23, %s42
      %s126 = ssub.s32 %s24, %s38
      %s127 = sor.u32 %s125, %s126
      %p128 = scmp.eq.s32.totalorder %s127, 0
      %s130 = sadd.s32 %s129, 1
      %s131 = scalar_select %p128, %s129, %s130
      %p134 = pneg %p128
      %p135 = scmp.eq.s32.totalorder %s16, 1
      %p136 = por %p134, %p135
      %p137 = scmp.ne.s32.totalorder %s129, %s132
      %p138 = scmp.eq.s32.totalorder %s16, 0
      %p139 = por %p137, %p138
      %p140 = scmp.ne.s32.totalorder %s129, %s132
      %p141 = scmp.eq.s32.totalorder %s21, 1
      %p142 = por %p140, %p141
      %p143 = scmp.ne.s32.totalorder %s132, %s133
      %p144 = scmp.eq.s32.totalorder %s21, 0
      %p145 = por %p143, %p144
      %p146 = scmp.ne.s32.totalorder %s132, %s133
      %p147 = scmp.eq.s32.totalorder %s22, 1
      %p148 = por %p146, %p147
      %p150 = scmp.ne.s32.totalorder %s133, %s149
      %p151 = scmp.eq.s32.totalorder %s22, 0
      %p152 = por %p150, %p151
      %p153 = scmp.le.s32.totalorder 1, %s16
      %p154 = scmp.lt.s32.totalorder %s16, 3
      %p155 = pnand %p153, %p154
      %p156 = pneg %p155
      // Predicated region
      $region9: #{tpu_custom_call.1} parent=5 // pred_check
        _
      $region10: #{tpu_custom_call.1} parent=5 // pred_check_branch
        %158 = sbr.rel (%p155) target = $region12
      $region11: #{tpu_custom_call.1} parent=5 // pred_region
        %s159 = ssub.s32 %s16, 1
        // Predicated region
        $region13: #{tpu_custom_call.1} parent=11 // pred_check
          %p160 = pneg %p63
        $region14: #{tpu_custom_call.1} parent=11 // pred_check_branch
          %162 = sbr.rel (%p160) target = $region16
        $region15: #{tpu_custom_call.1} parent=11 // pred_region
          %s163 = smul.u32 4, %s26
          %s164 = smul.u32 2, %s28
          %s166 = ssub.s32 512, 512
          %167 = vsyncadd [#allocation4], %s166
          %s168 = smul.addr %s163, 2
          %s169 = sadd.s32 %s164, %s168
          %s170 = smul.addr %s169, 64
          %s171 = scalar_lea.hbm %s0, %s170
          %s172 = sshll.u32 [#allocation3], 4
          %s173 = int_to_ptr.vmem [resolvable:$true] %s172
          %178 = dma.hbm_to_vmem [thread:$0]  %s171, 512, %s173, [#allocation4], 128, 128, 8
        $region16: #{tpu_custom_call.1} parent=11 // pred_fallthru
          _
      $region12: #{tpu_custom_call.1} parent=5 // pred_fallthru
        _
      %p179 = scmp.lt.s32.totalorder %s16, 2
      // Predicated region
      $region17: #{tpu_custom_call.1} parent=5 // pred_check
        %p180 = pneg %p179
      $region18: #{tpu_custom_call.1} parent=5 // pred_check_branch
        %182 = sbr.rel (%p180) target = $region20
      $region19: #{tpu_custom_call.1} parent=5 // pred_region
        // Predicated region
        $region21: #{tpu_custom_call.1} parent=19 // pred_check
          %p183 = pneg %p85
        $region22: #{tpu_custom_call.1} parent=19 // pred_check_branch
          %185 = sbr.rel (%p183) target = $region24
        $region23: #{tpu_custom_call.1} parent=19 // pred_region
          %s186 = sand.u32 %s16, 1
          %s187 = scalar_lea.sflag [#allocation7], %s186
          %s188 = sand.u32 %s75, 1
          %s189 = smul.addr %s188, 256
          %s190 = scalar_lea.vmem [#allocation6], %s189
          %s191 = smul.u32 32, %s25
          %s192 = smul.u32 2, %s24
          %s194 = ssub.s32 4096, 4096
          %195 = vsyncadd %s187, %s194
          %s196 = smul.addr %s191, 4
          %s197 = sadd.s32 %s192, %s196
          %s198 = smul.addr %s197, 64
          %s199 = scalar_lea.hbm %s1, %s198
          %s200 = sshll.u32 %s190, 4
          %s201 = int_to_ptr.vmem [resolvable:$true] %s200
          %206 = dma.hbm_to_vmem [thread:$0]  %s199, 4096, %s201, %s187, 256, 128, 8
        $region24: #{tpu_custom_call.1} parent=19 // pred_fallthru
          _
        // Predicated region
        $region25: #{tpu_custom_call.1} parent=19 // pred_check
          %p207 = pneg %p111
        $region26: #{tpu_custom_call.1} parent=19 // pred_check_branch
          %209 = sbr.rel (%p207) target = $region28
        $region27: #{tpu_custom_call.1} parent=19 // pred_region
          %s210 = sand.u32 %s16, 1
          %s211 = scalar_lea.sflag [#allocation7], %s210
          %s212 = sand.u32 %s101, 1
          %s213 = smul.addr %s212, 2
          %s214 = scalar_lea.vmem [#allocation8], %s213
          %s215 = smul.u32 2, %s24
          %s217 = ssub.s32 32, 32
          %218 = vsyncadd %s211, %s217
          %s219 = smul.addr %s215, 16
          %s220 = scalar_lea.hbm %s2, %s219
          %s222 = sshll.u32 %s214, 4
          %s223 = int_to_ptr.vmem [resolvable:$true] %s222
          %225 = dma.hbm_to_vmem [thread:$0]  %s220, 32, %s223, %s211
        $region28: #{tpu_custom_call.1} parent=19 // pred_fallthru
          _
      $region20: #{tpu_custom_call.1} parent=5 // pred_fallthru
        _
      %p226 = scmp.le.s32.totalorder 1, %s16
      %p227 = scmp.lt.s32.totalorder %s16, 3
      %p228 = pnand %p226, %p227
      %p229 = pneg %p228
      // Predicated region
      $region29: #{tpu_custom_call.1} parent=5 // pred_check
        _
      $region30: #{tpu_custom_call.1} parent=5 // pred_check_branch
        %231 = sbr.rel (%p228) target = $region32
      $region31: #{tpu_custom_call.1} parent=5 // pred_region
        %s232 = ssub.s32 %s16, 1
        // Predicated region
        $region33: #{tpu_custom_call.1} parent=31 // pred_check
          %p233 = pneg %p63
        $region34: #{tpu_custom_call.1} parent=31 // pred_check_branch
          %235 = sbr.rel (%p233) target = $region36
        $region35: #{tpu_custom_call.1} parent=31 // pred_region
          %236 = dma.done [#allocation4], 512
        $region36: #{tpu_custom_call.1} parent=31 // pred_fallthru
          _
        %s237 = sand.u32 %s21, 1
        %s238 = scalar_lea.sflag [#allocation7], %s237
        %s239 = sand.u32 %s78, 1
        %s240 = smul.addr %s239, 256
        %s241 = scalar_lea.vmem [#allocation6], %s240
        // Predicated region
        $region37: #{tpu_custom_call.1} parent=31 // pred_check
          %p242 = pneg %p91
        $region38: #{tpu_custom_call.1} parent=31 // pred_check_branch
          %244 = sbr.rel (%p242) target = $region40
        $region39: #{tpu_custom_call.1} parent=31 // pred_region
          %245 = dma.done %s238, 4096
        $region40: #{tpu_custom_call.1} parent=31 // pred_fallthru
          _
        %s246 = sand.u32 %s21, 1
        %s247 = scalar_lea.sflag [#allocation7], %s246
        %s248 = sand.u32 %s104, 1
        %s249 = smul.addr %s248, 2
        %s250 = scalar_lea.vmem [#allocation8], %s249
        // Predicated region
        $region41: #{tpu_custom_call.1} parent=31 // pred_check
          %p251 = pneg %p117
        $region42: #{tpu_custom_call.1} parent=31 // pred_check_branch
          %253 = sbr.rel (%p251) target = $region44
        $region43: #{tpu_custom_call.1} parent=31 // pred_region
          %254 = dma.done %s247, 32
        $region44: #{tpu_custom_call.1} parent=31 // pred_fallthru
          _
        %p255 = pneg %p63
        %p256 = pneg %p60
        %s257 = sand.u32 %s21, 1
        %s258 = scalar_lea.sflag [#allocation7], %s257
        %s259 = sand.u32 %s78, 1
        %s260 = smul.addr %s259, 256
        %s261 = scalar_lea.vmem [#allocation6], %s260
        %p262 = pneg %p91
        %p263 = pneg %p88
        %s264 = sand.u32 %s21, 1
        %s265 = scalar_lea.sflag [#allocation7], %s264
        %s266 = sand.u32 %s104, 1
        %s267 = smul.addr %s266, 2
        %s268 = scalar_lea.vmem [#allocation8], %s267
        %p269 = pneg %p117
        %p270 = pneg %p114
        %p271 = pneg %p145
        %p272 = pneg %p142
        %s273 = sand.u32 %s132, 1
        %s274 = scalar_lea.sflag [#allocation5], %s273
        %s275 = sand.u32 %s132, 1
        %s276 = smul.addr %s275, 32
        %s277 = scalar_lea.vmem [#allocation9], %s276
        %s278 = smul.u32 4, %s26
        %s279 = smul.u32 2, %s28
        %s280 = smul.u32 32, %s28
        %s281 = smul.u32 2, %s27
        %s282 = smul.u32 2, %s27
        %s283 = smul.u32 4, %s26
        %p284 = scmp.eq.s32.totalorder %s28, 0
        // Predicated region
        $region45: #{tpu_custom_call.1} parent=31 // pred_check
          %p285 = pneg %p284
        $region46: #{tpu_custom_call.1} parent=31 // pred_check_branch
          %287 = sbr.rel (%p285) target = $region48
        $region47: #{tpu_custom_call.1} parent=31 // pred_region
          %v288 = vld [vmem:[%s250] sm:$0x3]
          %v290 = vlaneseq
          %v291 = vshrl.u32 %v290, 7
          %v292 = vsub.s32 0, %v291
          %v293 = vrot.slane %v288, %v292
          %v294 = vlaneseq
          %v295 = vshrl.u32 %v294, 7
          %v296 = vsub.s32 1, %v295
          %v297 = vrot.slane %v288, %v296
          %300 = vst [vmem:[#allocation2] sm:$0xff] %v293
          %301 = vst [vmem:[#allocation2 + $0x8] sm:$0xff] %v297
          %302 = vst [vmem:[#allocation2 + $0x10] sm:$0xff] %v293
          %303 = vst [vmem:[#allocation2 + $0x18] sm:$0xff] %v297
          %304 = vst [vmem:[#allocation2 + $0x20] sm:$0xff] %v293
          %305 = vst [vmem:[#allocation2 + $0x28] sm:$0xff] %v297
          %306 = vst [vmem:[#allocation2 + $0x30] sm:$0xff] %v293
          %307 = vst [vmem:[#allocation2 + $0x38] sm:$0xff] %v297
        $region48: #{tpu_custom_call.1} parent=31 // pred_fallthru
          _
        %v308 = vld [vmem:[#allocation2] sm:$0xff]
        %v309 = vld [vmem:[#allocation2 + $0x8] sm:$0xff]
        %v310 = vld [vmem:[#allocation2 + $0x10] sm:$0xff]
        %v311 = vld [vmem:[#allocation2 + $0x18] sm:$0xff]
        %v312 = vld [vmem:[#allocation2 + $0x20] sm:$0xff]
        %v313 = vld [vmem:[#allocation2 + $0x28] sm:$0xff]
        %v314 = vld [vmem:[#allocation2 + $0x30] sm:$0xff]
        %v315 = vld [vmem:[#allocation2 + $0x38] sm:$0xff]
        %v316 = vld [vmem:[#allocation3] sm:$0xff]
        %v317 = vld [vmem:[#allocation3 + $0x8] sm:$0xff]
        %v318 = vld [vmem:[#allocation3 + $0x10] sm:$0xff]
        %v319 = vld [vmem:[#allocation3 + $0x18] sm:$0xff]
        %v320 = vld [vmem:[%s241] sm:$0xff]
        %v321 = vld [vmem:[%s241 + $0x8] sm:$0xff]
        %v322 = vld [vmem:[%s241 + $0x10] sm:$0xff]
        %v323 = vld [vmem:[%s241 + $0x18] sm:$0xff]
        %v324 = vld [vmem:[%s241 + $0x20] sm:$0xff]
        %v325 = vld [vmem:[%s241 + $0x28] sm:$0xff]
        %v326 = vld [vmem:[%s241 + $0x30] sm:$0xff]
        %v327 = vld [vmem:[%s241 + $0x38] sm:$0xff]
        %v328 = vld [vmem:[%s241 + $0x40] sm:$0xff]
        %v329 = vld [vmem:[%s241 + $0x48] sm:$0xff]
        %v330 = vld [vmem:[%s241 + $0x50] sm:$0xff]
        %v331 = vld [vmem:[%s241 + $0x58] sm:$0xff]
        %v332 = vld [vmem:[%s241 + $0x60] sm:$0xff]
        %v333 = vld [vmem:[%s241 + $0x68] sm:$0xff]
        %v334 = vld [vmem:[%s241 + $0x70] sm:$0xff]
        %v335 = vld [vmem:[%s241 + $0x78] sm:$0xff]
        %v336 = vld [vmem:[%s241 + $0x80] sm:$0xff]
        %v337 = vld [vmem:[%s241 + $0x88] sm:$0xff]
        %v338 = vld [vmem:[%s241 + $0x90] sm:$0xff]
        %v339 = vld [vmem:[%s241 + $0x98] sm:$0xff]
        %v340 = vld [vmem:[%s241 + $0xa0] sm:$0xff]
        %v341 = vld [vmem:[%s241 + $0xa8] sm:$0xff]
        %v342 = vld [vmem:[%s241 + $0xb0] sm:$0xff]
        %v343 = vld [vmem:[%s241 + $0xb8] sm:$0xff]
        %v344 = vld [vmem:[%s241 + $0xc0] sm:$0xff]
        %v345 = vld [vmem:[%s241 + $0xc8] sm:$0xff]
        %v346 = vld [vmem:[%s241 + $0xd0] sm:$0xff]
        %v347 = vld [vmem:[%s241 + $0xd8] sm:$0xff]
        %v348 = vld [vmem:[%s241 + $0xe0] sm:$0xff]
        %v349 = vld [vmem:[%s241 + $0xe8] sm:$0xff]
        %v350 = vld [vmem:[%s241 + $0xf0] sm:$0xff]
        %v351 = vld [vmem:[%s241 + $0xf8] sm:$0xff]
        %v356 = vunpack.c.l.b16 %v316
        %v357 = vunpack.c.h.b16 %v316
        %v358 = vunpack.c.l.b16 %v317
        %v359 = vunpack.c.h.b16 %v317
        %v360 = vunpack.c.l.b16 %v318
        %v361 = vunpack.c.h.b16 %v318
        %v362 = vunpack.c.l.b16 %v319
        %v363 = vunpack.c.h.b16 %v319
        %v364 = vpack.c.b16 %v358, %v356
        %v365 = vpack.c.b16 %v359, %v357
        %v366 = vpack.c.b16 %v362, %v360
        %v367 = vpack.c.b16 %v363, %v361
        %v404 = vunpack.c.l.b16 %v320
        %v405 = vunpack.c.h.b16 %v320
        %v406 = vunpack.c.l.b16 %v321
        %v407 = vunpack.c.h.b16 %v321
        %v408 = vunpack.c.l.b16 %v322
        %v409 = vunpack.c.h.b16 %v322
        %v410 = vunpack.c.l.b16 %v323
        %v411 = vunpack.c.h.b16 %v323
        %v412 = vunpack.c.l.b16 %v324
        %v413 = vunpack.c.h.b16 %v324
        %v414 = vunpack.c.l.b16 %v325
        %v415 = vunpack.c.h.b16 %v325
        %v416 = vunpack.c.l.b16 %v326
        %v417 = vunpack.c.h.b16 %v326
        %v418 = vunpack.c.l.b16 %v327
        %v419 = vunpack.c.h.b16 %v327
        %v420 = vunpack.c.l.b16 %v328
        %v421 = vunpack.c.h.b16 %v328
        %v422 = vunpack.c.l.b16 %v329
        %v423 = vunpack.c.h.b16 %v329
        %v424 = vunpack.c.l.b16 %v330
        %v425 = vunpack.c.h.b16 %v330
        %v426 = vunpack.c.l.b16 %v331
        %v427 = vunpack.c.h.b16 %v331
        %v428 = vunpack.c.l.b16 %v332
        %v429 = vunpack.c.h.b16 %v332
        %v430 = vunpack.c.l.b16 %v333
        %v431 = vunpack.c.h.b16 %v333
        %v432 = vunpack.c.l.b16 %v334
        %v433 = vunpack.c.h.b16 %v334
        %v434 = vunpack.c.l.b16 %v335
        %v435 = vunpack.c.h.b16 %v335
        %v436 = vunpack.c.l.b16 %v336
        %v437 = vunpack.c.h.b16 %v336
        %v438 = vunpack.c.l.b16 %v337
        %v439 = vunpack.c.h.b16 %v337
        %v440 = vunpack.c.l.b16 %v338
        %v441 = vunpack.c.h.b16 %v338
        %v442 = vunpack.c.l.b16 %v339
        %v443 = vunpack.c.h.b16 %v339
        %v444 = vunpack.c.l.b16 %v340
        %v445 = vunpack.c.h.b16 %v340
        %v446 = vunpack.c.l.b16 %v341
        %v447 = vunpack.c.h.b16 %v341
        %v448 = vunpack.c.l.b16 %v342
        %v449 = vunpack.c.h.b16 %v342
        %v450 = vunpack.c.l.b16 %v343
        %v451 = vunpack.c.h.b16 %v343
        %v452 = vunpack.c.l.b16 %v344
        %v453 = vunpack.c.h.b16 %v344
        %v454 = vunpack.c.l.b16 %v345
        %v455 = vunpack.c.h.b16 %v345
        %v456 = vunpack.c.l.b16 %v346
        %v457 = vunpack.c.h.b16 %v346
        %v458 = vunpack.c.l.b16 %v347
        %v459 = vunpack.c.h.b16 %v347
        %v460 = vunpack.c.l.b16 %v348
        %v461 = vunpack.c.h.b16 %v348
        %v462 = vunpack.c.l.b16 %v349
        %v463 = vunpack.c.h.b16 %v349
        %v464 = vunpack.c.l.b16 %v350
        %v465 = vunpack.c.h.b16 %v350
        %v466 = vunpack.c.l.b16 %v351
        %v467 = vunpack.c.h.b16 %v351
        %v468 = vpack.c.b16 %v406, %v404
        %v469 = vpack.c.b16 %v407, %v405
        %v470 = vpack.c.b16 %v410, %v408
        %v471 = vpack.c.b16 %v411, %v409
        %v472 = vpack.c.b16 %v414, %v412
        %v473 = vpack.c.b16 %v415, %v413
        %v474 = vpack.c.b16 %v418, %v416
        %v475 = vpack.c.b16 %v419, %v417
        %v476 = vpack.c.b16 %v422, %v420
        %v477 = vpack.c.b16 %v423, %v421
        %v478 = vpack.c.b16 %v426, %v424
        %v479 = vpack.c.b16 %v427, %v425
        %v480 = vpack.c.b16 %v430, %v428
        %v481 = vpack.c.b16 %v431, %v429
        %v482 = vpack.c.b16 %v434, %v432
        %v483 = vpack.c.b16 %v435, %v433
        %v484 = vpack.c.b16 %v438, %v436
        %v485 = vpack.c.b16 %v439, %v437
        %v486 = vpack.c.b16 %v442, %v440
        %v487 = vpack.c.b16 %v443, %v441
        %v488 = vpack.c.b16 %v446, %v444
        %v489 = vpack.c.b16 %v447, %v445
        %v490 = vpack.c.b16 %v450, %v448
        %v491 = vpack.c.b16 %v451, %v449
        %v492 = vpack.c.b16 %v454, %v452
        %v493 = vpack.c.b16 %v455, %v453
        %v494 = vpack.c.b16 %v458, %v456
        %v495 = vpack.c.b16 %v459, %v457
        %v496 = vpack.c.b16 %v462, %v460
        %v497 = vpack.c.b16 %v463, %v461
        %v498 = vpack.c.b16 %v466, %v464
        %v499 = vpack.c.b16 %v467, %v465
        %532 = vmatprep.subr.bf16.mxu0 %v483
        %533 = vmatpush1.bf16.msra.mxu0 %v482
        %534 = vmatprep.subr.bf16.mxu0 %v481
        %535 = vmatpush1.bf16.msra.mxu0 %v480
        %536 = vmatprep.subr.bf16.mxu0 %v479
        %537 = vmatpush1.bf16.msra.mxu0 %v478
        %538 = vmatprep.subr.bf16.mxu0 %v477
        %539 = vmatpush1.bf16.msra.mxu0 %v476
        %540 = vmatprep.subr.bf16.mxu0 %v475
        %541 = vmatpush1.bf16.msra.mxu0 %v474
        %542 = vmatprep.subr.bf16.mxu0 %v473
        %543 = vmatpush1.bf16.msra.mxu0 %v472
        %544 = vmatprep.subr.bf16.mxu0 %v471
        %545 = vmatpush1.bf16.msra.mxu0 %v470
        %546 = vmatprep.subr.bf16.mxu0 %v469
        %547 = vmatpush1.bf16.msra.mxu0 %v468
        %548 = vmatprep.subr.bf16.mxu0 %v499
        %549 = vmatpush2.bf16.msra.mxu0 %v498
        %550 = vmatprep.subr.bf16.mxu0 %v497
        %551 = vmatpush2.bf16.msra.mxu0 %v496
        %552 = vmatprep.subr.bf16.mxu0 %v495
        %553 = vmatpush2.bf16.msra.mxu0 %v494
        %554 = vmatprep.subr.bf16.mxu0 %v493
        %555 = vmatpush2.bf16.msra.mxu0 %v492
        %556 = vmatprep.subr.bf16.mxu0 %v491
        %557 = vmatpush2.bf16.msra.mxu0 %v490
        %558 = vmatprep.subr.bf16.mxu0 %v489
        %559 = vmatpush2.bf16.msra.mxu0 %v488
        %560 = vmatprep.subr.bf16.mxu0 %v487
        %561 = vmatpush2.bf16.msra.mxu0 %v486
        %562 = vmatprep.subr.bf16.mxu0 %v485
        %563 = vmatpush2.bf16.msra.mxu0 %v484
        %564 = vmatprep.mubr.bf16.mxu0 %v365
        %565 = vmatmul.mubr.bf16.gmra.mxu0 %v364
        %v566 = vpop.f32.mrf.mxu0
        %v567 = vadd.f32 0.0, %v566
        %v568 = vpop.f32.mrf.mxu0
        %v569 = vadd.f32 0.0, %v568
        %v570 = vpop.f32.mrf.mxu0
        %v571 = vadd.f32 0.0, %v570
        %v572 = vpop.f32.mrf.mxu0
        %v573 = vadd.f32 0.0, %v572
        %574 = vmatprep.mubr.bf16.mxu0 %v367
        %575 = vmatmul.mubr.bf16.gmra.mxu0 %v366
        %v576 = vpop.f32.mrf.mxu0
        %v577 = vadd.f32 0.0, %v576
        %v578 = vpop.f32.mrf.mxu0
        %v579 = vadd.f32 0.0, %v578
        %v580 = vpop.f32.mrf.mxu0
        %v581 = vadd.f32 0.0, %v580
        %v582 = vpop.f32.mrf.mxu0
        %v583 = vadd.f32 0.0, %v582
        %584 = vdwg.mxu0
        %v585 = vadd.f32 %v308, %v567
        %v586 = vadd.f32 %v309, %v569
        %v587 = vadd.f32 %v310, %v571
        %v588 = vadd.f32 %v311, %v573
        %v589 = vadd.f32 %v312, %v577
        %v590 = vadd.f32 %v313, %v579
        %v591 = vadd.f32 %v314, %v581
        %v592 = vadd.f32 %v315, %v583
        %593 = vst [vmem:[#allocation2] sm:$0xff] %v585
        %594 = vst [vmem:[#allocation2 + $0x8] sm:$0xff] %v586
        %595 = vst [vmem:[#allocation2 + $0x10] sm:$0xff] %v587
        %596 = vst [vmem:[#allocation2 + $0x18] sm:$0xff] %v588
        %597 = vst [vmem:[#allocation2 + $0x20] sm:$0xff] %v589
        %598 = vst [vmem:[#allocation2 + $0x28] sm:$0xff] %v590
        %599 = vst [vmem:[#allocation2 + $0x30] sm:$0xff] %v591
        %600 = vst [vmem:[#allocation2 + $0x38] sm:$0xff] %v592
        // Predicated region
        $region49: #{tpu_custom_call.1} parent=31 // pred_check
          %p601 = pneg %p284
        $region50: #{tpu_custom_call.1} parent=31 // pred_check_branch
          %603 = sbr.rel (%p601) target = $region52
        $region51: #{tpu_custom_call.1} parent=31 // pred_region
          %v604 = vld [vmem:[#allocation2] sm:$0xff]
          %v605 = vld [vmem:[#allocation2 + $0x10] sm:$0xff]
          %v606 = vld [vmem:[#allocation2 + $0x20] sm:$0xff]
          %v607 = vld [vmem:[#allocation2 + $0x30] sm:$0xff]
          %v608 = vld [vmem:[#allocation2 + $0x8] sm:$0xff]
          %v609 = vld [vmem:[#allocation2 + $0x18] sm:$0xff]
          %v610 = vld [vmem:[#allocation2 + $0x28] sm:$0xff]
          %v611 = vld [vmem:[#allocation2 + $0x38] sm:$0xff]
          %v612 = vmax.f32 %v604, %v608
          %v613 = vmax.f32 %v605, %v609
          %v614 = vmax.f32 %v606, %v610
          %v615 = vmax.f32 %v607, %v611
          %616 = vst [vmem:[%s277] sm:$0xff] %v612
          %617 = vst [vmem:[%s277 + $0x8] sm:$0xff] %v613
          %618 = vst [vmem:[%s277 + $0x10] sm:$0xff] %v614
          %619 = vst [vmem:[%s277 + $0x18] sm:$0xff] %v615
        $region52: #{tpu_custom_call.1} parent=31 // pred_fallthru
          _
        %s620 = sand.u32 %s132, 1
        %s621 = scalar_lea.sflag [#allocation5], %s620
        %s622 = sand.u32 %s132, 1
        %s623 = smul.addr %s622, 32
        %s624 = scalar_lea.vmem [#allocation9], %s623
        // Predicated region
        $region53: #{tpu_custom_call.1} parent=31 // pred_check
          %p625 = pneg %p142
        $region54: #{tpu_custom_call.1} parent=31 // pred_check_branch
          %627 = sbr.rel (%p625) target = $region56
        $region55: #{tpu_custom_call.1} parent=31 // pred_region
          %s628 = smul.u32 4, %s26
          %s630 = ssub.s32 512, 512
          %631 = vsyncadd %s621, %s630
          %s632 = smul.addr %s628, 2
          %s633 = sadd.s32 %s27, %s632
          %s634 = smul.addr %s633, 128
          %s635 = scalar_lea.hbm %s3, %s634
          %s636 = sshll.u32 %s624, 4
          %s637 = int_to_ptr.vmem [resolvable:$true] %s636
          %642 = dma.vmem_to_hbm [thread:$0]  %s637, 512, %s635, %s621, 128, 256, 8
        $region56: #{tpu_custom_call.1} parent=31 // pred_fallthru
          _
      $region32: #{tpu_custom_call.1} parent=5 // pred_fallthru
        _
      %p643 = scmp.le.s32.totalorder 2, %s16
      // Predicated region
      $region57: #{tpu_custom_call.1} parent=5 // pred_check
        %p644 = pneg %p643
      $region58: #{tpu_custom_call.1} parent=5 // pred_check_branch
        %646 = sbr.rel (%p644) target = $region60
      $region59: #{tpu_custom_call.1} parent=5 // pred_region
        %s647 = ssub.s32 %s16, 2
        // Predicated region
        $region61: #{tpu_custom_call.1} parent=59 // pred_check
          %p648 = pneg %p148
        $region62: #{tpu_custom_call.1} parent=59 // pred_check_branch
          %650 = sbr.rel (%p648) target = $region64
        $region63: #{tpu_custom_call.1} parent=59 // pred_region
          %s651 = sand.u32 %s133, 1
          %s652 = scalar_lea.sflag [#allocation5], %s651
          %s653 = sand.u32 %s133, 1
          %s654 = smul.addr %s653, 32
          %s655 = scalar_lea.vmem [#allocation9], %s654
          %656 = dma.done %s652, 512
        $region64: #{tpu_custom_call.1} parent=59 // pred_fallthru
          _
      $region60: #{tpu_custom_call.1} parent=5 // pred_fallthru
        _
    $region6: #{tpu_custom_call.1} parent=1 // loop_footer
      %s20 = sadd.s32 1, %s16
    $region7: #{tpu_custom_call.1} parent=1 // loop_footer_branch
      %15 = sbr.rel target = $region3
    $region8: #{tpu_custom_call.1} parent=1 // loop_exit
      _
    %657 = vsyncpa [#allocation4], 1
    %s658 = scalar_lea.sflag [#allocation4], 1
    %659 = vsyncpa %s658, 1
    %660 = vsyncpa [#allocation7], 1
    %s661 = scalar_lea.sflag [#allocation7], 1
    %662 = vsyncpa %s661, 1
    %663 = vsyncpa [#allocation5], 1
    %s664 = scalar_lea.sflag [#allocation5], 1
    %665 = vsyncpa %s664, 1

</llo_original>
